<compile_context>
chip_gen: v5e
topology: v5e:2x2
jax: 0.10.0
libtpu: 0.0.40
codegen_flags: <defaults>
</compile_context>

<pallas_src>
import jax
import jax.numpy as jnp
from jax.experimental import pallas as pl
from jax.experimental.pallas import tpu as pltpu


def drug3d_pool_kernel(batch_ref, x_ref, w_ref, b_ref, out_ref, acc_ref):
    """Fused global_mean_pool + linear_h (pool-then-project).

    Grid axis 0 tiles the node dimension N; out_ref stays resident.

    batch_ref: [1, T]    int32   graph id per node in this tile (-1 = padding)
    x_ref:     [T, V+1]  float32 node features with a trailing ones column
    w_ref:     [V+1, H]  float32 linear_h weight^T with a zero last row
    b_ref:     [1, H]    float32 linear_h bias
    out_ref:   [B, H]    float32 per-graph mean-pooled, projected features
    acc_ref:   [B, V+1]  float32 scratch: per-graph feature sums (+ counts)
    """
    step = pl.program_id(0)

    @pl.when(step == 0)
    def _():
        acc_ref[...] = jnp.zeros_like(acc_ref)

    seg = batch_ref[...]                                  # [1, T] int32
    n_graphs = acc_ref.shape[0]
    tile_n = x_ref.shape[0]

    # one-hot segment matrix [B, T]: onehot[g, n] = (batch[n] == g)
    gid = jax.lax.broadcasted_iota(jnp.int32, (n_graphs, tile_n), 0)
    onehot = (gid == seg).astype(jnp.float32)             # padding rows -> all 0

    # Segment-sum of [x | 1] over this node tile on the MXU; the trailing
    # column accumulates the per-graph node counts for free.
    acc_ref[...] += jnp.dot(onehot, x_ref[...],
                            preferred_element_type=jnp.float32)

    @pl.when(step == pl.num_programs(0) - 1)
    def _():
        acc = acc_ref[...]                                # [B, V+1]
        counts = acc[:, -1:]                              # [B, 1]
        mean_x = acc / jnp.maximum(counts, 1.0)           # exact (ints), guards empty graphs
        # Project AFTER pooling and add the bias AFTER pooling:
        #   mean(x @ W + b) == mean(x) @ W + b
        out_ref[...] = (jnp.dot(mean_x, w_ref[...],
                                preferred_element_type=jnp.float32)
                        + b_ref[...])


def drug3d_forward(x, batch, w_h, b_h, num_graphs, *, tile_n=512):
    """x: [N, V] f32, batch: [N] int32, w_h: [V, H] (transposed vs torch),
    b_h: [H] -> [num_graphs, H] f32."""
    n, v = x.shape
    hdim = w_h.shape[1]

    # Trailing ones column -> counts come out of the pooling matmul.
    x_aug = jnp.concatenate([x, jnp.ones((n, 1), x.dtype)], axis=1)        # [N, V+1]
    w_aug = jnp.concatenate([w_h, jnp.zeros((1, hdim), w_h.dtype)], axis=0)  # [V+1, H]
    vp = v + 1

    # Choose the node tile: single sublane-aligned tile for small N, otherwise
    # 128-aligned tiles so the (1, tile) batch block satisfies lane tiling.
    if n <= tile_n:
        tile = max(8, -(-n // 8) * 8)
    else:
        tile = tile_n - (tile_n % 128) if tile_n >= 128 else 128
    n_pad = -(-n // tile) * tile
    pad = n_pad - n
    batch = batch.astype(jnp.int32)
    if pad:
        # Padded rows: zero features (incl. ones column) and graph id -1, so
        # they contribute nothing to sums or counts.
        x_aug = jnp.pad(x_aug, ((0, pad), (0, 0)))
        batch = jnp.concatenate([batch, jnp.full((pad,), -1, jnp.int32)])

    batch_2d = batch.reshape(1, n_pad)
    bias_2d = b_h.reshape(1, hdim)

    return pl.pallas_call(
        drug3d_pool_kernel,
        out_shape=jax.ShapeDtypeStruct((num_graphs, hdim), jnp.float32),
        grid=(n_pad // tile,),
        in_specs=[
            pl.BlockSpec((1, tile), lambda i: (0, i)),     # batch ids
            pl.BlockSpec((tile, vp), lambda i: (i, 0)),    # node features
            pl.BlockSpec((vp, hdim), lambda i: (0, 0)),    # weight (resident)
            pl.BlockSpec((1, hdim), lambda i: (0, 0)),     # bias (resident)
        ],
        out_specs=pl.BlockSpec((num_graphs, hdim), lambda i: (0, 0)),  # accumulator-style
        scratch_shapes=[pltpu.VMEM((num_graphs, vp), jnp.float32)],
        compiler_params=pltpu.CompilerParams(
            dimension_semantics=("arbitrary",),            # reduction over node tiles
            vmem_limit_bytes=32 * 1024 * 1024,             # safe on v5e/v6e/v7x
        ),
    )(batch_2d, x_aug, w_aug, bias_2d)


def drug3d_reference(x, batch, w_h, b_h, num_graphs):
    """Pure-JAX reference of the effective forward pass."""
    h = x @ w_h + b_h[None, :]
    onehot = (batch[None, :] == jnp.arange(num_graphs)[:, None]).astype(jnp.float32)
    counts = jnp.maximum(onehot.sum(axis=1, keepdims=True), 1.0)
    return (onehot @ h) / counts


if __name__ == "__main__":
    # Shapes consistent with the module: d_vocab=21 node features, hidden=32.
    d_vocab = 21
    hidden_dim = 32
    d_edge = 16

    key = jax.random.PRNGKey(0)
    k_x, k_w, k_b, k_e, k_x2 = jax.random.split(key, 5)

    # linear_h parameters (stored transposed: [V, H]).
    w_h = jax.random.normal(k_w, (d_vocab, hidden_dim), dtype=jnp.float32) * 0.1
    b_h = jax.random.normal(k_b, (hidden_dim,), dtype=jnp.float32) * 0.1

    # --- test 1: small problem (single tile path) ------------------------
    num_nodes = 64
    num_graphs = 4
    x = jax.random.normal(k_x, (num_nodes, d_vocab), dtype=jnp.float32)
    batch = jnp.concatenate([
        jnp.full((10,), 0, jnp.int32),
        jnp.full((20,), 1, jnp.int32),
        jnp.full((14,), 2, jnp.int32),
        jnp.full((20,), 3, jnp.int32),
    ])

    # edge_attr / linear_e exist in the module but never reach the return
    # value (data.x is overwritten before pooling) — documented, unused.
    edge_attr = jax.random.normal(k_e, (128, d_edge), dtype=jnp.float32)
    _ = edge_attr

    out = jax.block_until_ready(drug3d_forward(x, batch, w_h, b_h, num_graphs))
    ref = drug3d_reference(x, batch, w_h, b_h, num_graphs)
    assert out.shape == (num_graphs, hidden_dim)
    assert jnp.allclose(out, ref, atol=1e-5, rtol=1e-5), "mismatch vs reference (small)"

    # --- test 2: larger problem exercising the tiled accumulation path ----
    num_nodes2 = 320
    num_graphs2 = 6
    sizes2 = [50, 70, 40, 60, 55, 45]  # sums to 320
    x2 = jax.random.normal(k_x2, (num_nodes2, d_vocab), dtype=jnp.float32)
    batch2 = jnp.concatenate(
        [jnp.full((s,), g, jnp.int32) for g, s in enumerate(sizes2)])

    out2 = jax.block_until_ready(
        drug3d_forward(x2, batch2, w_h, b_h, num_graphs2, tile_n=128))
    ref2 = drug3d_reference(x2, batch2, w_h, b_h, num_graphs2)
    assert out2.shape == (num_graphs2, hidden_dim)
    assert jnp.allclose(out2, ref2, atol=1e-5, rtol=1e-5), "mismatch vs reference (tiled)"

    print("KERNEL_OK")
</pallas_src>

<mosaic_0001>
module attributes {stable_mosaic.version = 11 : i64} {
  func.func @drug3d_pool_kernel(%arg0: i32, %arg1: memref<1x64xi32, #tpu.memory_space<vmem>>, %arg2: memref<64x22xf32, #tpu.memory_space<vmem>>, %arg3: memref<22x32xf32, #tpu.memory_space<vmem>>, %arg4: memref<1x32xf32, #tpu.memory_space<vmem>>, %arg5: memref<4x32xf32, #tpu.memory_space<vmem>>, %arg6: memref<4x22xf32, #tpu.memory_space<vmem>>) attributes {dimension_semantics = [#tpu.dimension_semantics<arbitrary>], iteration_bounds = array<i64: 1>, scalar_prefetch = 0 : i64, scratch_operands = 1 : i64, tpu.core_type = #tpu.core_type<tc>, window_params = [{transform_indices = @transform_0, window_bounds = array<i64: 1, 64>}, {transform_indices = @transform_1, window_bounds = array<i64: 64, 22>}, {pipeline_mode = #tpu.pipeline_mode<synchronous>, transform_indices = @transform_2, window_bounds = array<i64: 22, 32>}, {pipeline_mode = #tpu.pipeline_mode<synchronous>, transform_indices = @transform_3, window_bounds = array<i64: 1, 32>}, {pipeline_mode = #tpu.pipeline_mode<synchronous>, transform_indices = @transform_4, window_bounds = array<i64: 4, 32>}]} {
    %c0_i32 = arith.constant 0 : i32
    %0 = arith.cmpi eq, %arg0, %c0_i32 : i32
    %1 = arith.extui %0 : i1 to i32
    %c0_i32_0 = arith.constant 0 : i32
    %2 = arith.cmpi ne, %1, %c0_i32_0 : i32
    scf.if %2 {
      %cst_10 = arith.constant 0.000000e+00 : f32
      %17 = vector.broadcast %cst_10 : f32 to vector<4x22xf32>
      %c0_11 = arith.constant 0 : index
      %c0_12 = arith.constant 0 : index
      %18 = vector.load %arg6[%c0_11, %c0_12] : memref<4x22xf32, #tpu.memory_space<vmem>>, vector<4x22xf32>
      tpu.vector_store %arg6[%c0_11, %c0_12], %17 {strides = array<i32>} : memref<4x22xf32, #tpu.memory_space<vmem>>, vector<4x22xf32>,
    } else {
    }
    %c0 = arith.constant 0 : index
    %c0_1 = arith.constant 0 : index
    %3 = vector.load %arg1[%c0, %c0_1] : memref<1x64xi32, #tpu.memory_space<vmem>>, vector<1x64xi32>
    %4 = tpu.iota {dimensions = array<i32: 0>} : vector<4x64xi32>
    %5 = vector.broadcast %3 : vector<1x64xi32> to vector<4x64xi32>
    %6 = arith.cmpi eq, %4, %5 : vector<4x64xi32>
    %7 = arith.extui %6 : vector<4x64xi1> to vector<4x64xi32>
    %8 = arith.sitofp %7 : vector<4x64xi32> to vector<4x64xf32>
    %c0_2 = arith.constant 0 : index
    %c0_3 = arith.constant 0 : index
    %9 = vector.load %arg6[%c0_2, %c0_3] : memref<4x22xf32, #tpu.memory_space<vmem>>, vector<4x22xf32>
    %c0_4 = arith.constant 0 : index
    %c0_5 = arith.constant 0 : index
    %10 = vector.load %arg2[%c0_4, %c0_5] : memref<64x22xf32, #tpu.memory_space<vmem>>, vector<64x22xf32>
    %cst = arith.constant dense<0.000000e+00> : vector<4x22xf32>
    %11 = tpu.matmul %8, %10, %cst {dimension_numbers = #tpu.dot_dimension_numbers<[1], [0], [0], [1], [0, 0, 1, 1], [], []>} : vector<4x64xf32>, vector<64x22xf32>, vector<4x22xf32> -> vector<4x22xf32>
    %12 = arith.addf %9, %11 : vector<4x22xf32>
    %c0_6 = arith.constant 0 : index
    %c0_7 = arith.constant 0 : index
    %13 = vector.load %arg6[%c0_6, %c0_7] : memref<4x22xf32, #tpu.memory_space<vmem>>, vector<4x22xf32>
    tpu.vector_store %arg6[%c0_6, %c0_7], %12 {strides = array<i32>} : memref<4x22xf32, #tpu.memory_space<vmem>>, vector<4x22xf32>,
    %c0_i32_8 = arith.constant 0 : i32
    %14 = arith.cmpi eq, %arg0, %c0_i32_8 : i32
    %15 = arith.extui %14 : i1 to i32
    %c0_i32_9 = arith.constant 0 : i32
    %16 = arith.cmpi ne, %15, %c0_i32_9 : i32
    scf.if %16 {
      %c0_10 = arith.constant 0 : index
      %c0_11 = arith.constant 0 : index
      %17 = vector.load %arg6[%c0_10, %c0_11] : memref<4x22xf32, #tpu.memory_space<vmem>>, vector<4x22xf32>
      %18 = vector.extract_strided_slice %17 {offsets = [0, 21], sizes = [4, 1], strides = [1, 1]} : vector<4x22xf32> to vector<4x1xf32>
      %cst_12 = arith.constant 1.000000e+00 : f32
      %19 = vector.broadcast %cst_12 : f32 to vector<4x1xf32>
      %20 = arith.maximumf %18, %19 : vector<4x1xf32>
      %21 = vector.broadcast %20 : vector<4x1xf32> to vector<4x22xf32>
      %22 = arith.divf %17, %21 : vector<4x22xf32>
      %c0_13 = arith.constant 0 : index
      %c0_14 = arith.constant 0 : index
      %23 = vector.load %arg3[%c0_13, %c0_14] : memref<22x32xf32, #tpu.memory_space<vmem>>, vector<22x32xf32>
      %cst_15 = arith.constant dense<0.000000e+00> : vector<4x32xf32>
      %24 = tpu.matmul %22, %23, %cst_15 {dimension_numbers = #tpu.dot_dimension_numbers<[1], [0], [0], [1], [0, 0, 1, 1], [], []>} : vector<4x22xf32>, vector<22x32xf32>, vector<4x32xf32> -> vector<4x32xf32>
      %c0_16 = arith.constant 0 : index
      %c0_17 = arith.constant 0 : index
      %25 = vector.load %arg4[%c0_16, %c0_17] : memref<1x32xf32, #tpu.memory_space<vmem>>, vector<1x32xf32>
      %26 = vector.broadcast %25 : vector<1x32xf32> to vector<4x32xf32>
      %27 = arith.addf %24, %26 : vector<4x32xf32>
      %c0_18 = arith.constant 0 : index
      %c0_19 = arith.constant 0 : index
      %28 = vector.load %arg5[%c0_18, %c0_19] : memref<4x32xf32, #tpu.memory_space<vmem>>, vector<4x32xf32>
      tpu.vector_store %arg5[%c0_18, %c0_19], %27 {strides = array<i32>} : memref<4x32xf32, #tpu.memory_space<vmem>>, vector<4x32xf32>,
    } else {
    }
    return
  }
  func.func @transform_0(%arg0: i32) -> (i32, i32) {
    %c0_i32 = arith.constant 0 : i32
    %c0_i32_0 = arith.constant 0 : i32
    return %c0_i32, %arg0 : i32, i32
  }
  func.func @transform_1(%arg0: i32) -> (i32, i32) {
    %c0_i32 = arith.constant 0 : i32
    %c0_i32_0 = arith.constant 0 : i32
    return %arg0, %c0_i32 : i32, i32
  }
  func.func @transform_2(%arg0: i32) -> (i32, i32) {
    %c0_i32 = arith.constant 0 : i32
    %c0_i32_0 = arith.constant 0 : i32
    %c0_i32_1 = arith.constant 0 : i32
    return %c0_i32, %c0_i32_0 : i32, i32
  }
  func.func @transform_3(%arg0: i32) -> (i32, i32) {
    %c0_i32 = arith.constant 0 : i32
    %c0_i32_0 = arith.constant 0 : i32
    %c0_i32_1 = arith.constant 0 : i32
    return %c0_i32, %c0_i32_0 : i32, i32
  }
  func.func @transform_4(%arg0: i32) -> (i32, i32) {
    %c0_i32 = arith.constant 0 : i32
    %c0_i32_0 = arith.constant 0 : i32
    %c0_i32_1 = arith.constant 0 : i32
    return %c0_i32, %c0_i32_0 : i32, i32
  }
}

</mosaic_0001>

<llo_original>
// kernel: tpu_custom_call.1
$region0: #{tpu_custom_call.1}
  #allocation0 [shape = 'u32[]', space=smem, size = 0x4, offset = 0x4, fixed_abs, tag = 'smem constant byte address 0x4 - core index']
  #allocation1 [shape = 'u32[72,128]{1,0:T(1,128)}', space=vmem, size = 0x9000, scoped, tag = 'internal scratch']
  #allocation2 [shape = 'f32[4,22]{1,0:T(4,128)}', space=vmem, size = 0x800, scoped, tag = 'scratch operand']
  %s0 = inlined_call_operand.vmem [shape: s32[1,64], index: 0, kind: input, shape index: {}]
  %s1 = inlined_call_operand.vmem [shape: f32[64,22], index: 1, kind: input, shape index: {}]
  %s2 = inlined_call_operand.vmem [shape: f32[22,32], index: 2, kind: input, shape index: {}]
  %s3 = inlined_call_operand.vmem [shape: f32[1,32], index: 3, kind: input, shape index: {}]
  %s4 = inlined_call_operand.hbm [shape: f32[4,32], index: 4, kind: output, shape index: {}]
  %s5 = sld [smem:[#allocation0]]
  $region34: #{tpu_custom_call.1} parent=0
    _
  %s7 = ssub.s32 1, %s5
  %s8 = scalar_select 0, %s7, %s5
  $region1: #{tpu_custom_call.1} parent=0
    #allocation3 [shape = 'u8[2048]{0}', space=vmem, size = 0x800, scoped, tag = 'output window, operand 0, single buffered']
    #allocation4 [shape = 's32[1]{0}', space=sflag, size = 0x4, scoped, tag = 'scoped memory for tpu_custom_call.1']
    %9 = vsyncpa [#allocation4], 0
    // Predicated region
    $region2: #{tpu_custom_call.1} parent=1 // pred_check
      _
    $region3: #{tpu_custom_call.1} parent=1 // pred_check_branch
      %11 = sbr.rel (0) target = $region5
    $region4: #{tpu_custom_call.1} parent=1 // pred_region
      _
    $region5: #{tpu_custom_call.1} parent=1 // pred_fallthru
      _
    // Predicated region
    $region6: #{tpu_custom_call.1} parent=1 // pred_check
      _
    $region7: #{tpu_custom_call.1} parent=1 // pred_check_branch
      %13 = sbr.rel (0) target = $region9
    $region8: #{tpu_custom_call.1} parent=1 // pred_region
      _
    $region9: #{tpu_custom_call.1} parent=1 // pred_fallthru
      _
    // Predicated region
    $region10: #{tpu_custom_call.1} parent=1 // pred_check
      _
    $region11: #{tpu_custom_call.1} parent=1 // pred_check_branch
      %15 = sbr.rel (0) target = $region13
    $region12: #{tpu_custom_call.1} parent=1 // pred_region
      _
    $region13: #{tpu_custom_call.1} parent=1 // pred_fallthru
      _
    // Predicated region
    $region14: #{tpu_custom_call.1} parent=1 // pred_check
      _
    $region15: #{tpu_custom_call.1} parent=1 // pred_check_branch
      %17 = sbr.rel (0) target = $region17
    $region16: #{tpu_custom_call.1} parent=1 // pred_region
      _
    $region17: #{tpu_custom_call.1} parent=1 // pred_fallthru
      _
    %p18 = scmp.eq.s32.totalorder 0, 0
    // Predicated region
    $region18: #{tpu_custom_call.1} parent=1 // pred_check
      %p19 = pneg %p18
    $region19: #{tpu_custom_call.1} parent=1 // pred_check_branch
      %21 = sbr.rel (%p19) target = $region21
    $region20: #{tpu_custom_call.1} parent=1 // pred_region
      %vm22 = vcmask 175104
      %23 = vst.msk [vmem:[#allocation2] sm:$0xf] %vm22, 0.0
    $region21: #{tpu_custom_call.1} parent=1 // pred_fallthru
      _
    %v24 = vld [vmem:[%s0] sm:$0x1]
    %v25 = vlaneseq
    %v26 = vshrl.u32 %v25, 7
    %v27 = vperm.slane %v24, 0
    %vm28 = vcmp.eq.s32.totalorder %v26, %v27
    %v29 = vsel %vm28, 1, 0
    %v30 = vcvt.s32.f32 %v29
    %v31 = vld [vmem:[#allocation2] sm:$0xf]
    %v32 = vld [vmem:[%s1] sm:$0xff]
    %v33 = vld [vmem:[%s1 + $0x8] sm:$0xff]
    %v34 = vld [vmem:[%s1 + $0x10] sm:$0xff]
    %v35 = vld [vmem:[%s1 + $0x18] sm:$0xff]
    %v36 = vld [vmem:[%s1 + $0x20] sm:$0xff]
    %v37 = vld [vmem:[%s1 + $0x28] sm:$0xff]
    %v38 = vld [vmem:[%s1 + $0x30] sm:$0xff]
    %v39 = vld [vmem:[%s1 + $0x38] sm:$0xff]
    %vm40 = vcmask 523264
    %v42 = vsel %vm40, %v30, 0
    %44 = vmatpush.msra.mxu0 0.0
    %45 = vmatpush.msra.mxu0 0.0
    %46 = vmatpush.msra.mxu0 0.0
    %47 = vmatpush.msra.mxu0 0.0
    %48 = vmatpush.msra.mxu0 0.0
    %49 = vmatpush.msra.mxu0 0.0
    %50 = vmatpush.msra.mxu0 0.0
    %51 = vmatpush.msra.mxu0 0.0
    %52 = vmatpush.msra.mxu0 %v39
    %53 = vmatpush.msra.mxu0 %v38
    %54 = vmatpush.msra.mxu0 %v37
    %55 = vmatpush.msra.mxu0 %v36
    %56 = vmatpush.msra.mxu0 %v35
    %57 = vmatpush.msra.mxu0 %v34
    %58 = vmatpush.msra.mxu0 %v33
    %59 = vmatpush.msra.mxu0 %v32
    %60 = vmatmul.f32.gmra.mxu0 %v42
    %v61 = vpop.f32.mrf.mxu0
    %v62 = vadd.f32 0.0, %v61
    %63 = vdwg.mxu0
    %v64 = vadd.f32 %v31, %v62
    %vm65 = vcmask 175104
    %66 = vst.msk [vmem:[#allocation2] sm:$0xf] %vm65, %v64
    // Predicated region
    $region22: #{tpu_custom_call.1} parent=1 // pred_check
      %p67 = pneg %p18
    $region23: #{tpu_custom_call.1} parent=1 // pred_check_branch
      %69 = sbr.rel (%p67) target = $region25
    $region24: #{tpu_custom_call.1} parent=1 // pred_region
      %v70 = vld [vmem:[#allocation2] sm:$0xf]
      %v71 = vmax.f32 %v70, 1.0
      %73 = vset.pattern.permute.xlu0 21
      %74 = vperm.xlu0 %73, %v71
      %v75 = vpop.permute.xlu0 %74
      %v77 = vrcp.pop %v75
      %v78 = vmul.f32 %v75, %v77
      %v79 = vsub.f32 1.0, %v78
      %v80 = vmul.f32 %v77, %v79
      %v81 = vadd.f32 %v77, %v80
      %vm82 = vweird.f32 %v75
      %vm83 = vweird.f32 %v77
      %vm84 = vmor %vm82, %vm83
      %v85 = vsel %vm84, %v77, %v81
      %v86 = vand.u32 2147483647, %v75
      %vm87 = vcmp.eq.f32.partialorder %v86, 8.507059e+37
      %v88 = vand.u32 %v75, 2147483648
      %v89 = vor.u32 1.1754944e-38, %v88
      %v90 = vsel %vm87, %v89, %v85
      %v91 = vmul.f32 %v70, %v90
      %v92 = vld [vmem:[%s2] sm:$0xff]
      %v93 = vld [vmem:[%s2 + $0x8] sm:$0xff]
      %v94 = vld [vmem:[%s2 + $0x10] sm:$0x3f]
      %v95 = vld [vmem:[%s3] sm:$0x1]
      %v97 = vperm.slane %v95, 0
      %vm99 = vcmask 179200
      %v101 = vsel %vm99, %v91, 0
      %vm103 = vcmask 1045504
      %v105 = vsel %vm103, %v94, 0
      %107 = vmatpush.msra.mxu0 0.0
      %108 = vmatpush.msra.mxu0 0.0
      %109 = vmatpush.msra.mxu0 0.0
      %110 = vmatpush.msra.mxu0 0.0
      %111 = vmatpush.msra.mxu0 0.0
      %112 = vmatpush.msra.mxu0 0.0
      %113 = vmatpush.msra.mxu0 0.0
      %114 = vmatpush.msra.mxu0 0.0
      %115 = vmatpush.msra.mxu0 0.0
      %116 = vmatpush.msra.mxu0 0.0
      %117 = vmatpush.msra.mxu0 0.0
      %118 = vmatpush.msra.mxu0 0.0
      %119 = vmatpush.msra.mxu0 0.0
      %120 = vmatpush.msra.mxu0 %v105
      %121 = vmatpush.msra.mxu0 %v93
      %122 = vmatpush.msra.mxu0 %v92
      %123 = vmatmul.f32.gmra.mxu0 %v101
      %v124 = vpop.f32.mrf.mxu0
      %v125 = vadd.f32 %v97, %v124
      %126 = vdwg.mxu0
      %vm127 = vcmask 257024
      %128 = vst.msk [vmem:[#allocation3] sm:$0xf] %vm127, %v125
    $region25: #{tpu_custom_call.1} parent=1 // pred_fallthru
      _
    // Predicated region
    $region26: #{tpu_custom_call.1} parent=1 // pred_check
      _
    $region27: #{tpu_custom_call.1} parent=1 // pred_check_branch
      %130 = sbr.rel (0) target = $region29
    $region28: #{tpu_custom_call.1} parent=1 // pred_region
      %132 = vsyncadd [#allocation4], 0
      %s134 = sshll.u32 [#allocation3], 4
      %s135 = int_to_ptr.vmem [resolvable:$true] %s134
      %s136 = sshll.u32 %s4, 4
      %s137 = int_to_ptr.hbm [resolvable:$true] %s136
      %139 = dma.vmem_to_hbm [thread:$0]  %s135, 64, %s137, [#allocation4]
    $region29: #{tpu_custom_call.1} parent=1 // pred_fallthru
      _
    // Predicated region
    $region30: #{tpu_custom_call.1} parent=1 // pred_check
      _
    $region31: #{tpu_custom_call.1} parent=1 // pred_check_branch
      %141 = sbr.rel (0) target = $region33
    $region32: #{tpu_custom_call.1} parent=1 // pred_region
      %143 = dma.done [#allocation4], 64
    $region33: #{tpu_custom_call.1} parent=1 // pred_fallthru
      _
    %144 = vsyncpa [#allocation4], 1

</llo_original>
